<compile_context>
chip_gen: v7x
topology: tpu7x:2x2x1
jax: 0.10.0
libtpu: 0.0.40
codegen_flags: <defaults>
</compile_context>

<pallas_src>
import math

import jax
import jax.numpy as jnp
from jax.experimental import pallas as pl
from jax.experimental.pallas import tpu as pltpu

# ----------------------------------------------------------------------------- config
FNN_CONFIG = {
    "hidden_units": [64, 32],
    "dropout_rates": [0.1, 0.1],
    "use_layer_norm": True,
    "activation": "gelu",
    "final_units": [16],
    "final_dropout_rate": 0.1,
}

_LN_EPS = 1e-5
_LANE = 128


def _round_up(x, m):
    return ((x + m - 1) // m) * m


# --------------------------------------------------------------------------- in-kernel math
def _gelu(x):
    # tanh-approx GELU (PyTorch F.gelu(approximate='tanh')); tanh runs on the EUP
    # slot so the VALU cost is ~7 ops/element vs ~18 for the A&S erf polynomial.
    # TODO(synk): swap back to an erf polynomial if bit-parity with exact F.gelu is needed.
    c = 0.7978845608028654  # sqrt(2/pi)
    return 0.5 * x * (1.0 + jnp.tanh(c * (x + 0.044715 * x * x * x)))


def _layernorm(x, gamma, beta):
    # Zero-padded batch rows give var=0; rsqrt(0 + eps) is finite, so padding rows are safe.
    mean = jnp.mean(x, axis=-1, keepdims=True)
    xc = x - mean
    var = jnp.mean(xc * xc, axis=-1, keepdims=True)
    return xc * jax.lax.rsqrt(var + _LN_EPS) * gamma + beta


# --------------------------------------------------------------------------- parameter slabs
class _SlabPacker:
    """Packs 2-D parameter tensors row-wise into one (rows, 128) slab of one dtype.

    Each entry starts on a `row_align` boundary (16 for bf16 sublane packing,
    8 for f32). Returns static (row_offset, n_rows, n_cols) tuples used by the kernel.
    """

    def __init__(self, dtype, row_align):
        self.dtype = dtype
        self.row_align = row_align
        self.rows = 0
        self._items = []  # (row_offset, array)

    def add(self, arr):
        arr = jnp.asarray(arr, self.dtype)
        nrows, ncols = arr.shape
        assert ncols <= _LANE, f"feature width {ncols} exceeds lane width {_LANE}"
        off = _round_up(self.rows, self.row_align)
        self._items.append((off, arr))
        self.rows = off + nrows
        return (off, nrows, ncols)

    def finalize(self):
        total = _round_up(max(self.rows, self.row_align), self.row_align)
        slab = jnp.zeros((total, _LANE), self.dtype)
        for off, arr in self._items:
            slab = slab.at[off:off + arr.shape[0], :arr.shape[1]].set(arr)
        return slab


def _linear_params(key, in_f, out_f):
    # PyTorch nn.Linear default init: U(-1/sqrt(in_f), 1/sqrt(in_f)); weight stored
    # transposed as (in_f, out_f) so the kernel computes y = x @ W + b.
    k1, k2 = jax.random.split(key)
    bound = 1.0 / math.sqrt(in_f)
    W = jax.random.uniform(k1, (in_f, out_f), jnp.float32, -bound, bound)
    b = jax.random.uniform(k2, (1, out_f), jnp.float32, -bound, bound)
    return W, b


def build_packed_params(key, cgm_shape, other_features_shape):
    cgm_features = int(math.prod(cgm_shape)) if cgm_shape else 0
    other_features = int(math.prod(other_features_shape)) if other_features_shape else 0
    total_input = cgm_features + other_features
    assert cgm_features > 0

    wpk = _SlabPacker(jnp.bfloat16, row_align=16)   # MXU operands (bf16-native)
    vpk = _SlabPacker(jnp.float32, row_align=8)     # biases / LayerNorm params (f32)

    mm_kn = 0          # sum of K*N over all matmuls (for CostEstimate)
    act_elems = 0      # GELU elements per row
    ln_count = 0       # LayerNorm applications per row

    def add_first_weight(W):
        # Split weight rows so the first matmul consumes cgm / other inputs directly
        # (no wrapper-side concat+pad, no zero-padded K columns read from HBM).
        if other_features > 0:
            return (wpk.add(W[:cgm_features]), wpk.add(W[cgm_features:]))
        return (wpk.add(W), None)

    blocks = []
    in_f = total_input
    first = True
    for units in FNN_CONFIG["hidden_units"]:
        assert units <= _LANE
        key, k1, k2, kp = jax.random.split(key, 4)
        W1, b1 = _linear_params(k1, in_f, units)
        W2, b2 = _linear_params(k2, units, units)
        has_proj = in_f != units
        fused = has_proj and (2 * units <= _LANE)
        blk = {"units": units, "has_proj": has_proj, "fused": fused, "first": first}
        if fused:
            # dense1 + residual projection fused into one wider MXU push.
            Wp, bp = _linear_params(kp, in_f, units)
            Wcat = jnp.concatenate([W1, Wp], axis=1)
            bcat = jnp.concatenate([b1, bp], axis=1)
            blk["W1Wp"] = add_first_weight(Wcat) if first else (wpk.add(Wcat), None)
            blk["b1bp"] = vpk.add(bcat)
            mm_kn += in_f * 2 * units
        else:
            blk["W1"] = add_first_weight(W1) if first else (wpk.add(W1), None)
            blk["b1"] = vpk.add(b1)
            mm_kn += in_f * units
            if has_proj:
                Wp, bp = _linear_params(kp, in_f, units)
                blk["Wp"] = add_first_weight(Wp) if first else (wpk.add(Wp), None)
                blk["bp"] = vpk.add(bp)
                mm_kn += in_f * units
        blk["g1"] = vpk.add(jnp.ones((1, units), jnp.float32))
        blk["be1"] = vpk.add(jnp.zeros((1, units), jnp.float32))
        blk["W2"] = wpk.add(W2)
        blk["b2"] = vpk.add(b2)
        blk["g2"] = vpk.add(jnp.ones((1, units), jnp.float32))
        blk["be2"] = vpk.add(jnp.zeros((1, units), jnp.float32))
        mm_kn += units * units
        act_elems += 2 * units
        ln_count += 2
        blocks.append(blk)
        in_f = units
        first = False

    finals = []
    for units in FNN_CONFIG["final_units"]:
        key, kf = jax.random.split(key)
        W, b = _linear_params(kf, in_f, units)
        finals.append({
            "W": wpk.add(W), "b": vpk.add(b),
            "g": vpk.add(jnp.ones((1, units), jnp.float32)),
            "be": vpk.add(jnp.zeros((1, units), jnp.float32)),
        })
        mm_kn += in_f * units
        act_elems += units
        ln_count += 1
        in_f = units

    key, ko = jax.random.split(key)
    Wo, bo = _linear_params(ko, in_f, 1)
    # Output head runs on the VPU (broadcast-mul + lane reduce), so store W^T as a row.
    out_l = {"Wt": vpk.add(Wo.T), "b": vpk.add(bo)}
    mm_kn += in_f

    w_slab = wpk.finalize()
    v_slab = vpk.finalize()
    layout = {
        "blocks": blocks, "final": finals, "out": out_l,
        "cgm_features": cgm_features, "other_features": other_features,
        "w_rows": w_slab.shape[0], "v_rows": v_slab.shape[0],
        "mm_kn": mm_kn, "act_elems": act_elems, "ln_count": ln_count,
    }
    return w_slab, v_slab, layout


# --------------------------------------------------------------------------- kernel factory
def make_fnn_kernel(layout):
    """Builds a kernel closed over the static packed-parameter layout (Python ints only)."""
    has_other = layout["other_features"] > 0

    def kernel(*refs):
        if has_other:
            cgm_ref, other_ref, wslab_ref, vslab_ref, out_ref = refs
        else:
            cgm_ref, wslab_ref, vslab_ref, out_ref = refs
            other_ref = None

        def rdw(e):   # bf16 weight slab
            r, n, c = e
            return wslab_ref[r:r + n, 0:c]

        def rdv(e):   # f32 bias / LayerNorm slab
            r, n, c = e
            return vslab_ref[r:r + n, 0:c]

        def mm(xs, went):
            # xs: tuple of bf16 operands matching the (cgm, other) row split of `went`.
            e0, e1 = went
            acc = jnp.dot(xs[0], rdw(e0), preferred_element_type=jnp.float32)
            if e1 is not None:
                acc = acc + jnp.dot(xs[1], rdw(e1), preferred_element_type=jnp.float32)
            return acc

        if has_other:
            x_ops = (cgm_ref[...], other_ref[...])     # already bf16
        else:
            x_ops = (cgm_ref[...],)
        x = None  # f32 activations after the first block

        # ---------------- hidden ResidualBlocks ----------------
        for blk in layout["blocks"]:
            units = blk["units"]
            xs = x_ops if blk["first"] else (x.astype(jnp.bfloat16),)
            if blk["fused"]:
                h_all = mm(xs, blk["W1Wp"]) + rdv(blk["b1bp"])
                h = h_all[:, :units]
                identity = h_all[:, units:2 * units]
            else:
                h = mm(xs, blk["W1"]) + rdv(blk["b1"])
                if blk["has_proj"]:
                    identity = mm(xs, blk["Wp"]) + rdv(blk["bp"])
                elif blk["first"]:
                    identity = jnp.concatenate(
                        [o.astype(jnp.float32) for o in x_ops], axis=1)
                else:
                    identity = x
            h = _layernorm(h, rdv(blk["g1"]), rdv(blk["be1"]))
            h = _gelu(h)
            # dropout1: identity (eval mode)
            h = jnp.dot(h.astype(jnp.bfloat16), rdw(blk["W2"]),
                        preferred_element_type=jnp.float32) + rdv(blk["b2"])
            h = _layernorm(h, rdv(blk["g2"]), rdv(blk["be2"]))
            x = _gelu(h + identity)
            # dropout2: identity (eval mode)

        # ---------------- final layers: Linear -> GELU -> LayerNorm ----------
        for fl in layout["final"]:
            h = jnp.dot(x.astype(jnp.bfloat16), rdw(fl["W"]),
                        preferred_element_type=jnp.float32) + rdv(fl["b"])
            h = _gelu(h)
            x = _layernorm(h, rdv(fl["g"]), rdv(fl["be"]))
            # final dropout: identity (eval mode)

        # ---------------- output layer (scalar regression head) ----------------
        # Computed on the VPU: broadcast-multiply by Wo^T then lane reduce — avoids a
        # near-empty N=1 MXU push; the XLU reduce slot is idle at this point.
        wt = rdv(layout["out"]["Wt"])     # (1, in_f) f32
        bo = rdv(layout["out"]["b"])      # (1, 1)    f32
        out_ref[...] = jnp.sum(x * wt, axis=-1, keepdims=True) + bo

    return kernel


# --------------------------------------------------------------------------- wrapper
def make_fnn_forward(layout, max_batch_tile=4096):
    # max_batch_tile=4096 keeps the handful of (tb, 128) f32 temporaries plus the
    # double-buffered input blocks well inside v7x's 64 MiB VMEM (32 MiB default
    # scoped); on v5e/v6e (128 MiB VMEM) it can be raised to 8192.
    kernel = make_fnn_kernel(layout)
    cgm_f = layout["cgm_features"]
    other_f = layout["other_features"]
    w_rows = layout["w_rows"]
    v_rows = layout["v_rows"]
    mm_kn = layout["mm_kn"]
    act_elems = layout["act_elems"]
    ln_count = layout["ln_count"]

    @jax.jit
    def forward(cgm_input, other_input, w_slab, v_slab):
        B = cgm_input.shape[0]
        cgm_flat = cgm_input.reshape(B, -1).astype(jnp.bfloat16)
        other = other_input.reshape(B, -1).astype(jnp.bfloat16) if other_f > 0 else None

        target = _round_up(B, 16)                 # bf16 sublane packing = 16 rows
        tb = min(target, max_batch_tile)
        if target >= 32:
            # Ensure >= 2 grid steps so v7x's two TensorCores can split the batch axis.
            tb = min(tb, _round_up((target + 1) // 2, 16))
        b_pad = _round_up(B, tb)

        cgm_flat = jnp.pad(cgm_flat, ((0, b_pad - B), (0, 0)))
        inputs = [cgm_flat]
        in_specs = [pl.BlockSpec((tb, cgm_f), lambda i: (i, 0))]
        if other_f > 0:
            other_p = jnp.pad(other, ((0, b_pad - B), (0, 0)))
            inputs.append(other_p)
            in_specs.append(pl.BlockSpec((tb, other_f), lambda i: (i, 0)))
        inputs += [w_slab, v_slab]
        in_specs += [
            # parameter slabs: constant index -> single DMA, VMEM-resident across tiles
            pl.BlockSpec((w_rows, _LANE), lambda i: (0, 0)),
            pl.BlockSpec((v_rows, _LANE), lambda i: (0, 0)),
        ]

        flops = 2 * b_pad * mm_kn
        transcendentals = b_pad * (act_elems + ln_count)
        bytes_accessed = (b_pad * (cgm_f + other_f) * 2 + b_pad * 4
                          + w_rows * _LANE * 2 + v_rows * _LANE * 4)

        out = pl.pallas_call(
            kernel,
            out_shape=jax.ShapeDtypeStruct((b_pad, 1), jnp.float32),
            grid=(b_pad // tb,),
            in_specs=in_specs,
            out_specs=pl.BlockSpec((tb, 1), lambda i: (i, 0)),
            compiler_params=pltpu.CompilerParams(
                dimension_semantics=("parallel",)),
            cost_estimate=pl.CostEstimate(
                flops=flops, transcendentals=transcendentals,
                bytes_accessed=bytes_accessed),
        )(*inputs)
        return out[:B]

    return forward


# --------------------------------------------------------------------------- main
if __name__ == "__main__":
    key = jax.random.PRNGKey(0)

    batch = 4
    cgm_shape = (16, 3)            # (timesteps, channels) -> 48 flattened features
    other_features_shape = (6,)

    kp, kc, ko = jax.random.split(key, 3)
    w_slab, v_slab, layout = build_packed_params(kp, cgm_shape, other_features_shape)
    forward = make_fnn_forward(layout)

    cgm_input = jax.random.normal(kc, (batch,) + cgm_shape, jnp.float32)
    other_input = jax.random.normal(ko, (batch,) + other_features_shape, jnp.float32)

    out = forward(cgm_input, other_input, w_slab, v_slab)
    jax.block_until_ready(out)
    assert out.shape == (batch, 1)
    print("KERNEL_OK")
</pallas_src>

<mosaic_0001>
module attributes {stable_mosaic.version = 11 : i64} {
  func.func @kernel(%arg0: i32, %arg1: memref<16x48xbf16, #tpu.memory_space<vmem>>, %arg2: memref<16x6xbf16, #tpu.memory_space<vmem>>, %arg3: memref<256x128xbf16, #tpu.memory_space<vmem>>, %arg4: memref<136x128xf32, #tpu.memory_space<vmem>>, %arg5: memref<16x1xf32, #tpu.memory_space<vmem>>) attributes {dimension_semantics = [#tpu.dimension_semantics<parallel>], iteration_bounds = array<i64: 1>, scalar_prefetch = 0 : i64, scratch_operands = 0 : i64, tpu.core_type = #tpu.core_type<tc>, window_params = [{transform_indices = @transform_0, window_bounds = array<i64: 16, 48>}, {transform_indices = @transform_1, window_bounds = array<i64: 16, 6>}, {pipeline_mode = #tpu.pipeline_mode<synchronous>, transform_indices = @transform_2, window_bounds = array<i64: 256, 128>}, {pipeline_mode = #tpu.pipeline_mode<synchronous>, transform_indices = @transform_3, window_bounds = array<i64: 136, 128>}, {transform_indices = @transform_4, window_bounds = array<i64: 16, 1>}]} {
    %c0 = arith.constant 0 : index
    %c0_0 = arith.constant 0 : index
    %0 = vector.load %arg1[%c0, %c0_0] : memref<16x48xbf16, #tpu.memory_space<vmem>>, vector<16x48xbf16>
    %c0_1 = arith.constant 0 : index
    %c0_2 = arith.constant 0 : index
    %1 = vector.load %arg2[%c0_1, %c0_2] : memref<16x6xbf16, #tpu.memory_space<vmem>>, vector<16x6xbf16>
    %c0_3 = arith.constant 0 : index
    %c0_4 = arith.constant 0 : index
    %2 = vector.load %arg3[%c0_3, %c0_4] : memref<256x128xbf16, #tpu.memory_space<vmem>>, vector<48x128xbf16>
    %cst = arith.constant dense<0.000000e+00> : vector<16x128xf32>
    %3 = tpu.matmul %0, %2, %cst {dimension_numbers = #tpu.dot_dimension_numbers<[1], [0], [0], [1], [0, 0, 1, 1], [], []>} : vector<16x48xbf16>, vector<48x128xbf16>, vector<16x128xf32> -> vector<16x128xf32>
    %c48 = arith.constant 48 : index
    %c0_5 = arith.constant 0 : index
    %4 = vector.load %arg3[%c48, %c0_5] : memref<256x128xbf16, #tpu.memory_space<vmem>>, vector<6x128xbf16>
    %cst_6 = arith.constant dense<0.000000e+00> : vector<16x128xf32>
    %5 = tpu.matmul %1, %4, %cst_6 {dimension_numbers = #tpu.dot_dimension_numbers<[1], [0], [0], [1], [0, 0, 1, 1], [], []>} : vector<16x6xbf16>, vector<6x128xbf16>, vector<16x128xf32> -> vector<16x128xf32>
    %6 = arith.addf %3, %5 : vector<16x128xf32>
    %c0_7 = arith.constant 0 : index
    %c0_8 = arith.constant 0 : index
    %7 = vector.load %arg4[%c0_7, %c0_8] : memref<136x128xf32, #tpu.memory_space<vmem>>, vector<1x128xf32>
    %8 = vector.broadcast %7 : vector<1x128xf32> to vector<16x128xf32>
    %9 = arith.addf %6, %8 : vector<16x128xf32>
    %10 = vector.extract_strided_slice %9 {offsets = [0, 0], sizes = [16, 64], strides = [1, 1]} : vector<16x128xf32> to vector<16x64xf32>
    %11 = vector.extract_strided_slice %9 {offsets = [0, 64], sizes = [16, 64], strides = [1, 1]} : vector<16x128xf32> to vector<16x64xf32>
    %c8 = arith.constant 8 : index
    %c0_9 = arith.constant 0 : index
    %12 = vector.load %arg4[%c8, %c0_9] : memref<136x128xf32, #tpu.memory_space<vmem>>, vector<1x64xf32>
    %c16 = arith.constant 16 : index
    %c0_10 = arith.constant 0 : index
    %13 = vector.load %arg4[%c16, %c0_10] : memref<136x128xf32, #tpu.memory_space<vmem>>, vector<1x64xf32>
    %cst_11 = arith.constant dense<0.000000e+00> : vector<16xf32>
    %14 = vector.multi_reduction <add>, %10, %cst_11 [1] : vector<16x64xf32> to vector<16xf32>
    %15 = vector.shape_cast %14 : vector<16xf32> to vector<16x1xf32>
    %cst_12 = arith.constant 6.400000e+01 : f32
    %16 = vector.broadcast %cst_12 : f32 to vector<16x1xf32>
    %17 = arith.divf %15, %16 : vector<16x1xf32>
    %18 = vector.broadcast %17 : vector<16x1xf32> to vector<16x64xf32>
    %19 = arith.subf %10, %18 : vector<16x64xf32>
    %20 = arith.mulf %19, %19 : vector<16x64xf32>
    %cst_13 = arith.constant dense<0.000000e+00> : vector<16xf32>
    %21 = vector.multi_reduction <add>, %20, %cst_13 [1] : vector<16x64xf32> to vector<16xf32>
    %22 = vector.shape_cast %21 : vector<16xf32> to vector<16x1xf32>
    %cst_14 = arith.constant 6.400000e+01 : f32
    %23 = vector.broadcast %cst_14 : f32 to vector<16x1xf32>
    %24 = arith.divf %22, %23 : vector<16x1xf32>
    %cst_15 = arith.constant 9.99999974E-6 : f32
    %25 = vector.broadcast %cst_15 : f32 to vector<16x1xf32>
    %26 = arith.addf %24, %25 : vector<16x1xf32>
    %27 = math.rsqrt %26 : vector<16x1xf32>
    %28 = vector.broadcast %27 : vector<16x1xf32> to vector<16x64xf32>
    %29 = arith.mulf %19, %28 : vector<16x64xf32>
    %30 = vector.broadcast %12 : vector<1x64xf32> to vector<16x64xf32>
    %31 = arith.mulf %29, %30 : vector<16x64xf32>
    %32 = vector.broadcast %13 : vector<1x64xf32> to vector<16x64xf32>
    %33 = arith.addf %31, %32 : vector<16x64xf32>
    %cst_16 = arith.constant 5.000000e-01 : f32
    %34 = vector.broadcast %cst_16 : f32 to vector<16x64xf32>
    %35 = arith.mulf %34, %33 : vector<16x64xf32>
    %cst_17 = arith.constant 4.471500e-02 : f32
    %36 = vector.broadcast %cst_17 : f32 to vector<16x64xf32>
    %37 = arith.mulf %36, %33 : vector<16x64xf32>
    %38 = arith.mulf %37, %33 : vector<16x64xf32>
    %39 = arith.mulf %38, %33 : vector<16x64xf32>
    %40 = arith.addf %33, %39 : vector<16x64xf32>
    %cst_18 = arith.constant 0.797884583 : f32
    %41 = vector.broadcast %cst_18 : f32 to vector<16x64xf32>
    %42 = arith.mulf %41, %40 : vector<16x64xf32>
    %43 = math.tanh %42 : vector<16x64xf32>
    %cst_19 = arith.constant 1.000000e+00 : f32
    %44 = vector.broadcast %cst_19 : f32 to vector<16x64xf32>
    %45 = arith.addf %44, %43 : vector<16x64xf32>
    %46 = arith.mulf %35, %45 : vector<16x64xf32>
    %47 = arith.truncf %46 : vector<16x64xf32> to vector<16x64xbf16>
    %c64 = arith.constant 64 : index
    %c0_20 = arith.constant 0 : index
    %48 = vector.load %arg3[%c64, %c0_20] : memref<256x128xbf16, #tpu.memory_space<vmem>>, vector<64x64xbf16>
    %cst_21 = arith.constant dense<0.000000e+00> : vector<16x64xf32>
    %49 = tpu.matmul %47, %48, %cst_21 {dimension_numbers = #tpu.dot_dimension_numbers<[1], [0], [0], [1], [0, 0, 1, 1], [], []>} : vector<16x64xbf16>, vector<64x64xbf16>, vector<16x64xf32> -> vector<16x64xf32>
    %c24 = arith.constant 24 : index
    %c0_22 = arith.constant 0 : index
    %50 = vector.load %arg4[%c24, %c0_22] : memref<136x128xf32, #tpu.memory_space<vmem>>, vector<1x64xf32>
    %51 = vector.broadcast %50 : vector<1x64xf32> to vector<16x64xf32>
    %52 = arith.addf %49, %51 : vector<16x64xf32>
    %c32 = arith.constant 32 : index
    %c0_23 = arith.constant 0 : index
    %53 = vector.load %arg4[%c32, %c0_23] : memref<136x128xf32, #tpu.memory_space<vmem>>, vector<1x64xf32>
    %c40 = arith.constant 40 : index
    %c0_24 = arith.constant 0 : index
    %54 = vector.load %arg4[%c40, %c0_24] : memref<136x128xf32, #tpu.memory_space<vmem>>, vector<1x64xf32>
    %cst_25 = arith.constant dense<0.000000e+00> : vector<16xf32>
    %55 = vector.multi_reduction <add>, %52, %cst_25 [1] : vector<16x64xf32> to vector<16xf32>
    %56 = vector.shape_cast %55 : vector<16xf32> to vector<16x1xf32>
    %cst_26 = arith.constant 6.400000e+01 : f32
    %57 = vector.broadcast %cst_26 : f32 to vector<16x1xf32>
    %58 = arith.divf %56, %57 : vector<16x1xf32>
    %59 = vector.broadcast %58 : vector<16x1xf32> to vector<16x64xf32>
    %60 = arith.subf %52, %59 : vector<16x64xf32>
    %61 = arith.mulf %60, %60 : vector<16x64xf32>
    %cst_27 = arith.constant dense<0.000000e+00> : vector<16xf32>
    %62 = vector.multi_reduction <add>, %61, %cst_27 [1] : vector<16x64xf32> to vector<16xf32>
    %63 = vector.shape_cast %62 : vector<16xf32> to vector<16x1xf32>
    %cst_28 = arith.constant 6.400000e+01 : f32
    %64 = vector.broadcast %cst_28 : f32 to vector<16x1xf32>
    %65 = arith.divf %63, %64 : vector<16x1xf32>
    %cst_29 = arith.constant 9.99999974E-6 : f32
    %66 = vector.broadcast %cst_29 : f32 to vector<16x1xf32>
    %67 = arith.addf %65, %66 : vector<16x1xf32>
    %68 = math.rsqrt %67 : vector<16x1xf32>
    %69 = vector.broadcast %68 : vector<16x1xf32> to vector<16x64xf32>
    %70 = arith.mulf %60, %69 : vector<16x64xf32>
    %71 = vector.broadcast %53 : vector<1x64xf32> to vector<16x64xf32>
    %72 = arith.mulf %70, %71 : vector<16x64xf32>
    %73 = vector.broadcast %54 : vector<1x64xf32> to vector<16x64xf32>
    %74 = arith.addf %72, %73 : vector<16x64xf32>
    %75 = arith.addf %74, %11 : vector<16x64xf32>
    %cst_30 = arith.constant 5.000000e-01 : f32
    %76 = vector.broadcast %cst_30 : f32 to vector<16x64xf32>
    %77 = arith.mulf %76, %75 : vector<16x64xf32>
    %cst_31 = arith.constant 4.471500e-02 : f32
    %78 = vector.broadcast %cst_31 : f32 to vector<16x64xf32>
    %79 = arith.mulf %78, %75 : vector<16x64xf32>
    %80 = arith.mulf %79, %75 : vector<16x64xf32>
    %81 = arith.mulf %80, %75 : vector<16x64xf32>
    %82 = arith.addf %75, %81 : vector<16x64xf32>
    %cst_32 = arith.constant 0.797884583 : f32
    %83 = vector.broadcast %cst_32 : f32 to vector<16x64xf32>
    %84 = arith.mulf %83, %82 : vector<16x64xf32>
    %85 = math.tanh %84 : vector<16x64xf32>
    %cst_33 = arith.constant 1.000000e+00 : f32
    %86 = vector.broadcast %cst_33 : f32 to vector<16x64xf32>
    %87 = arith.addf %86, %85 : vector<16x64xf32>
    %88 = arith.mulf %77, %87 : vector<16x64xf32>
    %89 = arith.truncf %88 : vector<16x64xf32> to vector<16x64xbf16>
    %c128 = arith.constant 128 : index
    %c0_34 = arith.constant 0 : index
    %90 = vector.load %arg3[%c128, %c0_34] : memref<256x128xbf16, #tpu.memory_space<vmem>>, vector<64x64xbf16>
    %cst_35 = arith.constant dense<0.000000e+00> : vector<16x64xf32>
    %91 = tpu.matmul %89, %90, %cst_35 {dimension_numbers = #tpu.dot_dimension_numbers<[1], [0], [0], [1], [0, 0, 1, 1], [], []>} : vector<16x64xbf16>, vector<64x64xbf16>, vector<16x64xf32> -> vector<16x64xf32>
    %c48_36 = arith.constant 48 : index
    %c0_37 = arith.constant 0 : index
    %92 = vector.load %arg4[%c48_36, %c0_37] : memref<136x128xf32, #tpu.memory_space<vmem>>, vector<1x64xf32>
    %93 = vector.broadcast %92 : vector<1x64xf32> to vector<16x64xf32>
    %94 = arith.addf %91, %93 : vector<16x64xf32>
    %95 = vector.extract_strided_slice %94 {offsets = [0, 0], sizes = [16, 32], strides = [1, 1]} : vector<16x64xf32> to vector<16x32xf32>
    %96 = vector.extract_strided_slice %94 {offsets = [0, 32], sizes = [16, 32], strides = [1, 1]} : vector<16x64xf32> to vector<16x32xf32>
    %c56 = arith.constant 56 : index
    %c0_38 = arith.constant 0 : index
    %97 = vector.load %arg4[%c56, %c0_38] : memref<136x128xf32, #tpu.memory_space<vmem>>, vector<1x32xf32>
    %c64_39 = arith.constant 64 : index
    %c0_40 = arith.constant 0 : index
    %98 = vector.load %arg4[%c64_39, %c0_40] : memref<136x128xf32, #tpu.memory_space<vmem>>, vector<1x32xf32>
    %cst_41 = arith.constant dense<0.000000e+00> : vector<16xf32>
    %99 = vector.multi_reduction <add>, %95, %cst_41 [1] : vector<16x32xf32> to vector<16xf32>
    %100 = vector.shape_cast %99 : vector<16xf32> to vector<16x1xf32>
    %cst_42 = arith.constant 3.200000e+01 : f32
    %101 = vector.broadcast %cst_42 : f32 to vector<16x1xf32>
    %102 = arith.divf %100, %101 : vector<16x1xf32>
    %103 = vector.broadcast %102 : vector<16x1xf32> to vector<16x32xf32>
    %104 = arith.subf %95, %103 : vector<16x32xf32>
    %105 = arith.mulf %104, %104 : vector<16x32xf32>
    %cst_43 = arith.constant dense<0.000000e+00> : vector<16xf32>
    %106 = vector.multi_reduction <add>, %105, %cst_43 [1] : vector<16x32xf32> to vector<16xf32>
    %107 = vector.shape_cast %106 : vector<16xf32> to vector<16x1xf32>
    %cst_44 = arith.constant 3.200000e+01 : f32
    %108 = vector.broadcast %cst_44 : f32 to vector<16x1xf32>
    %109 = arith.divf %107, %108 : vector<16x1xf32>
    %cst_45 = arith.constant 9.99999974E-6 : f32
    %110 = vector.broadcast %cst_45 : f32 to vector<16x1xf32>
    %111 = arith.addf %109, %110 : vector<16x1xf32>
    %112 = math.rsqrt %111 : vector<16x1xf32>
    %113 = vector.broadcast %112 : vector<16x1xf32> to vector<16x32xf32>
    %114 = arith.mulf %104, %113 : vector<16x32xf32>
    %115 = vector.broadcast %97 : vector<1x32xf32> to vector<16x32xf32>
    %116 = arith.mulf %114, %115 : vector<16x32xf32>
    %117 = vector.broadcast %98 : vector<1x32xf32> to vector<16x32xf32>
    %118 = arith.addf %116, %117 : vector<16x32xf32>
    %cst_46 = arith.constant 5.000000e-01 : f32
    %119 = vector.broadcast %cst_46 : f32 to vector<16x32xf32>
    %120 = arith.mulf %119, %118 : vector<16x32xf32>
    %cst_47 = arith.constant 4.471500e-02 : f32
    %121 = vector.broadcast %cst_47 : f32 to vector<16x32xf32>
    %122 = arith.mulf %121, %118 : vector<16x32xf32>
    %123 = arith.mulf %122, %118 : vector<16x32xf32>
    %124 = arith.mulf %123, %118 : vector<16x32xf32>
    %125 = arith.addf %118, %124 : vector<16x32xf32>
    %cst_48 = arith.constant 0.797884583 : f32
    %126 = vector.broadcast %cst_48 : f32 to vector<16x32xf32>
    %127 = arith.mulf %126, %125 : vector<16x32xf32>
    %128 = math.tanh %127 : vector<16x32xf32>
    %cst_49 = arith.constant 1.000000e+00 : f32
    %129 = vector.broadcast %cst_49 : f32 to vector<16x32xf32>
    %130 = arith.addf %129, %128 : vector<16x32xf32>
    %131 = arith.mulf %120, %130 : vector<16x32xf32>
    %132 = arith.truncf %131 : vector<16x32xf32> to vector<16x32xbf16>
    %c192 = arith.constant 192 : index
    %c0_50 = arith.constant 0 : index
    %133 = vector.load %arg3[%c192, %c0_50] : memref<256x128xbf16, #tpu.memory_space<vmem>>, vector<32x32xbf16>
    %cst_51 = arith.constant dense<0.000000e+00> : vector<16x32xf32>
    %134 = tpu.matmul %132, %133, %cst_51 {dimension_numbers = #tpu.dot_dimension_numbers<[1], [0], [0], [1], [0, 0, 1, 1], [], []>} : vector<16x32xbf16>, vector<32x32xbf16>, vector<16x32xf32> -> vector<16x32xf32>
    %c72 = arith.constant 72 : index
    %c0_52 = arith.constant 0 : index
    %135 = vector.load %arg4[%c72, %c0_52] : memref<136x128xf32, #tpu.memory_space<vmem>>, vector<1x32xf32>
    %136 = vector.broadcast %135 : vector<1x32xf32> to vector<16x32xf32>
    %137 = arith.addf %134, %136 : vector<16x32xf32>
    %c80 = arith.constant 80 : index
    %c0_53 = arith.constant 0 : index
    %138 = vector.load %arg4[%c80, %c0_53] : memref<136x128xf32, #tpu.memory_space<vmem>>, vector<1x32xf32>
    %c88 = arith.constant 88 : index
    %c0_54 = arith.constant 0 : index
    %139 = vector.load %arg4[%c88, %c0_54] : memref<136x128xf32, #tpu.memory_space<vmem>>, vector<1x32xf32>
    %cst_55 = arith.constant dense<0.000000e+00> : vector<16xf32>
    %140 = vector.multi_reduction <add>, %137, %cst_55 [1] : vector<16x32xf32> to vector<16xf32>
    %141 = vector.shape_cast %140 : vector<16xf32> to vector<16x1xf32>
    %cst_56 = arith.constant 3.200000e+01 : f32
    %142 = vector.broadcast %cst_56 : f32 to vector<16x1xf32>
    %143 = arith.divf %141, %142 : vector<16x1xf32>
    %144 = vector.broadcast %143 : vector<16x1xf32> to vector<16x32xf32>
    %145 = arith.subf %137, %144 : vector<16x32xf32>
    %146 = arith.mulf %145, %145 : vector<16x32xf32>
    %cst_57 = arith.constant dense<0.000000e+00> : vector<16xf32>
    %147 = vector.multi_reduction <add>, %146, %cst_57 [1] : vector<16x32xf32> to vector<16xf32>
    %148 = vector.shape_cast %147 : vector<16xf32> to vector<16x1xf32>
    %cst_58 = arith.constant 3.200000e+01 : f32
    %149 = vector.broadcast %cst_58 : f32 to vector<16x1xf32>
    %150 = arith.divf %148, %149 : vector<16x1xf32>
    %cst_59 = arith.constant 9.99999974E-6 : f32
    %151 = vector.broadcast %cst_59 : f32 to vector<16x1xf32>
    %152 = arith.addf %150, %151 : vector<16x1xf32>
    %153 = math.rsqrt %152 : vector<16x1xf32>
    %154 = vector.broadcast %153 : vector<16x1xf32> to vector<16x32xf32>
    %155 = arith.mulf %145, %154 : vector<16x32xf32>
    %156 = vector.broadcast %138 : vector<1x32xf32> to vector<16x32xf32>
    %157 = arith.mulf %155, %156 : vector<16x32xf32>
    %158 = vector.broadcast %139 : vector<1x32xf32> to vector<16x32xf32>
    %159 = arith.addf %157, %158 : vector<16x32xf32>
    %160 = arith.addf %159, %96 : vector<16x32xf32>
    %cst_60 = arith.constant 5.000000e-01 : f32
    %161 = vector.broadcast %cst_60 : f32 to vector<16x32xf32>
    %162 = arith.mulf %161, %160 : vector<16x32xf32>
    %cst_61 = arith.constant 4.471500e-02 : f32
    %163 = vector.broadcast %cst_61 : f32 to vector<16x32xf32>
    %164 = arith.mulf %163, %160 : vector<16x32xf32>
    %165 = arith.mulf %164, %160 : vector<16x32xf32>
    %166 = arith.mulf %165, %160 : vector<16x32xf32>
    %167 = arith.addf %160, %166 : vector<16x32xf32>
    %cst_62 = arith.constant 0.797884583 : f32
    %168 = vector.broadcast %cst_62 : f32 to vector<16x32xf32>
    %169 = arith.mulf %168, %167 : vector<16x32xf32>
    %170 = math.tanh %169 : vector<16x32xf32>
    %cst_63 = arith.constant 1.000000e+00 : f32
    %171 = vector.broadcast %cst_63 : f32 to vector<16x32xf32>
    %172 = arith.addf %171, %170 : vector<16x32xf32>
    %173 = arith.mulf %162, %172 : vector<16x32xf32>
    %174 = arith.truncf %173 : vector<16x32xf32> to vector<16x32xbf16>
    %c224 = arith.constant 224 : index
    %c0_64 = arith.constant 0 : index
    %175 = vector.load %arg3[%c224, %c0_64] : memref<256x128xbf16, #tpu.memory_space<vmem>>, vector<32x16xbf16>
    %cst_65 = arith.constant dense<0.000000e+00> : vector<16x16xf32>
    %176 = tpu.matmul %174, %175, %cst_65 {dimension_numbers = #tpu.dot_dimension_numbers<[1], [0], [0], [1], [0, 0, 1, 1], [], []>} : vector<16x32xbf16>, vector<32x16xbf16>, vector<16x16xf32> -> vector<16x16xf32>
    %c96 = arith.constant 96 : index
    %c0_66 = arith.constant 0 : index
    %177 = vector.load %arg4[%c96, %c0_66] : memref<136x128xf32, #tpu.memory_space<vmem>>, vector<1x16xf32>
    %178 = vector.broadcast %177 : vector<1x16xf32> to vector<16x16xf32>
    %179 = arith.addf %176, %178 : vector<16x16xf32>
    %cst_67 = arith.constant 5.000000e-01 : f32
    %180 = vector.broadcast %cst_67 : f32 to vector<16x16xf32>
    %181 = arith.mulf %180, %179 : vector<16x16xf32>
    %cst_68 = arith.constant 4.471500e-02 : f32
    %182 = vector.broadcast %cst_68 : f32 to vector<16x16xf32>
    %183 = arith.mulf %182, %179 : vector<16x16xf32>
    %184 = arith.mulf %183, %179 : vector<16x16xf32>
    %185 = arith.mulf %184, %179 : vector<16x16xf32>
    %186 = arith.addf %179, %185 : vector<16x16xf32>
    %cst_69 = arith.constant 0.797884583 : f32
    %187 = vector.broadcast %cst_69 : f32 to vector<16x16xf32>
    %188 = arith.mulf %187, %186 : vector<16x16xf32>
    %189 = math.tanh %188 : vector<16x16xf32>
    %cst_70 = arith.constant 1.000000e+00 : f32
    %190 = vector.broadcast %cst_70 : f32 to vector<16x16xf32>
    %191 = arith.addf %190, %189 : vector<16x16xf32>
    %192 = arith.mulf %181, %191 : vector<16x16xf32>
    %c104 = arith.constant 104 : index
    %c0_71 = arith.constant 0 : index
    %193 = vector.load %arg4[%c104, %c0_71] : memref<136x128xf32, #tpu.memory_space<vmem>>, vector<1x16xf32>
    %c112 = arith.constant 112 : index
    %c0_72 = arith.constant 0 : index
    %194 = vector.load %arg4[%c112, %c0_72] : memref<136x128xf32, #tpu.memory_space<vmem>>, vector<1x16xf32>
    %cst_73 = arith.constant dense<0.000000e+00> : vector<16xf32>
    %195 = vector.multi_reduction <add>, %192, %cst_73 [1] : vector<16x16xf32> to vector<16xf32>
    %196 = vector.shape_cast %195 : vector<16xf32> to vector<16x1xf32>
    %cst_74 = arith.constant 1.600000e+01 : f32
    %197 = vector.broadcast %cst_74 : f32 to vector<16x1xf32>
    %198 = arith.divf %196, %197 : vector<16x1xf32>
    %199 = vector.broadcast %198 : vector<16x1xf32> to vector<16x16xf32>
    %200 = arith.subf %192, %199 : vector<16x16xf32>
    %201 = arith.mulf %200, %200 : vector<16x16xf32>
    %cst_75 = arith.constant dense<0.000000e+00> : vector<16xf32>
    %202 = vector.multi_reduction <add>, %201, %cst_75 [1] : vector<16x16xf32> to vector<16xf32>
    %203 = vector.shape_cast %202 : vector<16xf32> to vector<16x1xf32>
    %cst_76 = arith.constant 1.600000e+01 : f32
    %204 = vector.broadcast %cst_76 : f32 to vector<16x1xf32>
    %205 = arith.divf %203, %204 : vector<16x1xf32>
    %cst_77 = arith.constant 9.99999974E-6 : f32
    %206 = vector.broadcast %cst_77 : f32 to vector<16x1xf32>
    %207 = arith.addf %205, %206 : vector<16x1xf32>
    %208 = math.rsqrt %207 : vector<16x1xf32>
    %209 = vector.broadcast %208 : vector<16x1xf32> to vector<16x16xf32>
    %210 = arith.mulf %200, %209 : vector<16x16xf32>
    %211 = vector.broadcast %193 : vector<1x16xf32> to vector<16x16xf32>
    %212 = arith.mulf %210, %211 : vector<16x16xf32>
    %213 = vector.broadcast %194 : vector<1x16xf32> to vector<16x16xf32>
    %214 = arith.addf %212, %213 : vector<16x16xf32>
    %c120 = arith.constant 120 : index
    %c0_78 = arith.constant 0 : index
    %215 = vector.load %arg4[%c120, %c0_78] : memref<136x128xf32, #tpu.memory_space<vmem>>, vector<1x16xf32>
    %c128_79 = arith.constant 128 : index
    %c0_80 = arith.constant 0 : index
    %216 = vector.load %arg4[%c128_79, %c0_80] : memref<136x128xf32, #tpu.memory_space<vmem>>, vector<1x1xf32>
    %217 = vector.broadcast %215 : vector<1x16xf32> to vector<16x16xf32>
    %218 = arith.mulf %214, %217 : vector<16x16xf32>
    %cst_81 = arith.constant dense<0.000000e+00> : vector<16xf32>
    %219 = vector.multi_reduction <add>, %218, %cst_81 [1] : vector<16x16xf32> to vector<16xf32>
    %220 = vector.shape_cast %219 : vector<16xf32> to vector<16x1xf32>
    %221 = vector.broadcast %216 : vector<1x1xf32> to vector<16x1xf32>
    %222 = arith.addf %220, %221 : vector<16x1xf32>
    %c0_82 = arith.constant 0 : index
    %c0_83 = arith.constant 0 : index
    %223 = vector.load %arg5[%c0_82, %c0_83] : memref<16x1xf32, #tpu.memory_space<vmem>>, vector<16x1xf32>
    tpu.vector_store %arg5[%c0_82, %c0_83], %222 {strides = array<i32>} : memref<16x1xf32, #tpu.memory_space<vmem>>, vector<16x1xf32>,
    return
  }
  func.func @transform_0(%arg0: i32) -> (i32, i32) {
    %c0_i32 = arith.constant 0 : i32
    %c0_i32_0 = arith.constant 0 : i32
    return %arg0, %c0_i32 : i32, i32
  }
  func.func @transform_1(%arg0: i32) -> (i32, i32) {
    %c0_i32 = arith.constant 0 : i32
    %c0_i32_0 = arith.constant 0 : i32
    return %arg0, %c0_i32 : i32, i32
  }
  func.func @transform_2(%arg0: i32) -> (i32, i32) {
    %c0_i32 = arith.constant 0 : i32
    %c0_i32_0 = arith.constant 0 : i32
    %c0_i32_1 = arith.constant 0 : i32
    return %c0_i32, %c0_i32_0 : i32, i32
  }
  func.func @transform_3(%arg0: i32) -> (i32, i32) {
    %c0_i32 = arith.constant 0 : i32
    %c0_i32_0 = arith.constant 0 : i32
    %c0_i32_1 = arith.constant 0 : i32
    return %c0_i32, %c0_i32_0 : i32, i32
  }
  func.func @transform_4(%arg0: i32) -> (i32, i32) {
    %c0_i32 = arith.constant 0 : i32
    %c0_i32_0 = arith.constant 0 : i32
    return %arg0, %c0_i32 : i32, i32
  }
}

</mosaic_0001>

<llo_original>
// kernel: forward.1
$region0: #{forward.1}
  #allocation0 [shape = 'u32[]', space=smem, size = 0x4, offset = 0x4, fixed_abs, tag = 'smem constant byte address 0x4 - core index']
  #allocation1 [shape = 'u32[144,128]{1,0:T(1,128)}', space=vmem, size = 0x12000, scoped, tag = 'internal scratch']
  %s0 = inlined_call_operand.vmem [shape: bf16[16,48], index: 0, kind: input, shape index: {}]
  %s1 = inlined_call_operand.vmem [shape: bf16[16,6], index: 1, kind: input, shape index: {}]
  %s2 = inlined_call_operand.hbm [shape: bf16[256,128], index: 2, kind: input, shape index: {}]
  %s3 = inlined_call_operand.hbm [shape: f32[136,128], index: 3, kind: input, shape index: {}]
  %s4 = inlined_call_operand.vmem [shape: f32[16,1], index: 4, kind: output, shape index: {}]
  %s5 = sld [smem:[#allocation0]]
  $region34: #{forward.1} parent=0
    _
  %s7 = ssub.s32 1, %s5
  %s8 = scalar_select 0, %s7, %s5
  $region1: #{forward.1} parent=0
    #allocation2 [shape = 'u8[65536]{0}', space=vmem, size = 0x10000, scoped, tag = 'input window, operand 2, single buffered']
    #allocation3 [shape = 's32[1]{0}', space=sflag, size = 0x4, scoped, tag = 'scoped memory for forward.1']
    #allocation4 [shape = 'u8[69632]{0}', space=vmem, size = 0x11000, scoped, tag = 'input window, operand 3, single buffered']
    #allocation5 [shape = 's32[1]{0}', space=sflag, size = 0x4, scoped, tag = 'scoped memory for forward.1']
    %9 = vsyncpa [#allocation3], 0
    %10 = vsyncpa [#allocation5], 0
    // Predicated region
    $region2: #{forward.1} parent=1 // pred_check
      _
    $region3: #{forward.1} parent=1 // pred_check_branch
      %12 = sbr.rel (0) target = $region5
    $region4: #{forward.1} parent=1 // pred_region
      _
    $region5: #{forward.1} parent=1 // pred_fallthru
      _
    // Predicated region
    $region6: #{forward.1} parent=1 // pred_check
      _
    $region7: #{forward.1} parent=1 // pred_check_branch
      %14 = sbr.rel (0) target = $region9
    $region8: #{forward.1} parent=1 // pred_region
      _
    $region9: #{forward.1} parent=1 // pred_fallthru
      _
    // Predicated region
    $region10: #{forward.1} parent=1 // pred_check
      _
    $region11: #{forward.1} parent=1 // pred_check_branch
      %16 = sbr.rel (0) target = $region13
    $region12: #{forward.1} parent=1 // pred_region
      %s18 = ssub.s32 2048, 2048
      %19 = vsyncadd [#allocation3], %s18
      %s20 = sshll.u32 [#allocation2], 4
      %s21 = int_to_ptr.vmem [resolvable:$true] %s20
      %26 = dma.hbm_to_vmem [thread:$0]  %s2, 2048, %s21, [#allocation3], 64, 64, 4
    $region13: #{forward.1} parent=1 // pred_fallthru
      _
    // Predicated region
    $region14: #{forward.1} parent=1 // pred_check
      _
    $region15: #{forward.1} parent=1 // pred_check_branch
      %28 = sbr.rel (0) target = $region17
    $region16: #{forward.1} parent=1 // pred_region
      %s30 = ssub.s32 2176, 2176
      %31 = vsyncadd [#allocation5], %s30
      %s32 = sshll.u32 [#allocation4], 4
      %s33 = int_to_ptr.vmem [resolvable:$true] %s32
      %38 = dma.hbm_to_vmem [thread:$0]  %s3, 2176, %s33, [#allocation5], 128, 128, 8
    $region17: #{forward.1} parent=1 // pred_fallthru
      _
    // Predicated region
    $region18: #{forward.1} parent=1 // pred_check
      _
    $region19: #{forward.1} parent=1 // pred_check_branch
      %40 = sbr.rel (0) target = $region21
    $region20: #{forward.1} parent=1 // pred_region
      %41 = dma.done [#allocation3], 2048
    $region21: #{forward.1} parent=1 // pred_fallthru
      _
    // Predicated region
    $region22: #{forward.1} parent=1 // pred_check
      _
    $region23: #{forward.1} parent=1 // pred_check_branch
      %43 = sbr.rel (0) target = $region25
    $region24: #{forward.1} parent=1 // pred_region
      %44 = dma.done [#allocation5], 2176
    $region25: #{forward.1} parent=1 // pred_fallthru
      _
    %v46 = vld [vmem:[%s0] sm:$0xf]
    %v47 = vld [vmem:[%s0 + $0x4] sm:$0xf]
    %v48 = vld [vmem:[%s1] sm:$0xf]
    %v49 = vld [vmem:[%s1 + $0x4] sm:$0xf]
    %v50 = vld [vmem:[#allocation2] sm:$0xf]
    %v51 = vld [vmem:[#allocation2 + $0x4] sm:$0xf]
    %v52 = vld [vmem:[#allocation2 + $0x8] sm:$0xf]
    %v53 = vld [vmem:[#allocation2 + $0xc] sm:$0xf]
    %v54 = vld [vmem:[#allocation2 + $0x10] sm:$0xf]
    %v55 = vld [vmem:[#allocation2 + $0x14] sm:$0xf]
    %v56 = vld [vmem:[#allocation2 + $0x18] sm:$0x7]
    %v59 = vunpack.c.l.b16 %v48
    %v60 = vunpack.c.l.b16 %v49
    %v61 = vpack.c.b16 %v60, %v59
    %vm62 = vcmask 48128
    %v64 = vsel %vm62, %v61, 0
    %vm66 = vcmask 1042432
    %v68 = vsel %vm66, %v56, 0
    %70 = vmatprep.subr.bf16.mxu0 0
    %71 = vmatpush1.bf16.msra.mxu0 %v68
    %72 = vmatprep.subr.bf16.mxu0 0
    %73 = vmatpush1.bf16.msra.mxu0 0
    %74 = vmatprep.subr.bf16.mxu0 0
    %75 = vmatpush1.bf16.msra.mxu0 0
    %76 = vmatprep.subr.bf16.mxu0 0
    %77 = vmatpush1.bf16.msra.mxu0 0
    %78 = vmatprep.subr.bf16.mxu0 0
    %79 = vmatpush1.bf16.msra.mxu0 0
    %80 = vmatprep.subr.bf16.mxu0 0
    %81 = vmatpush1.bf16.msra.mxu0 0
    %82 = vmatprep.subr.bf16.mxu0 0
    %83 = vmatpush1.bf16.msra.mxu0 0
    %84 = vmatprep.subr.bf16.mxu0 0
    %85 = vmatpush1.bf16.msra.mxu0 0
    %86 = vmatprep.subr.bf16.mxu0 0
    %87 = vmatpush1.bf16.msra.mxu0 0
    %88 = vmatprep.subr.bf16.mxu0 0
    %89 = vmatpush1.bf16.msra.mxu0 0
    %90 = vmatprep.subr.bf16.mxu0 0
    %91 = vmatpush1.bf16.msra.mxu0 0
    %92 = vmatprep.subr.bf16.mxu0 0
    %93 = vmatpush1.bf16.msra.mxu0 0
    %94 = vmatprep.subr.bf16.mxu0 0
    %95 = vmatpush1.bf16.msra.mxu0 0
    %96 = vmatprep.subr.bf16.mxu0 0
    %97 = vmatpush1.bf16.msra.mxu0 0
    %98 = vmatprep.subr.bf16.mxu0 0
    %99 = vmatpush1.bf16.msra.mxu0 0
    %100 = vmatprep.subr.bf16.mxu0 0
    %101 = vmatpush1.bf16.msra.mxu0 0
    %102 = vmatprep.mubr.bf16.mxu0 0
    %103 = vmatmul.mubr.bf16.gmra.mrb[0].mxu0 %v64
    %v104 = vpop.f32.mrb[0].mxu0
    %v105 = vadd.f32 0.0, %v104
    %v106 = vpop.f32.mrb[0].mxu0
    %v107 = vpop.f32.mrb[0].mxu0
    %v108 = vadd.f32 0.0, %v107
    %v109 = vpop.f32.mrb[0].mxu0
    %110 = vdwg.mxu0
    %v113 = vunpack.c.l.b16 %v46
    %v114 = vunpack.c.l.b16 %v47
    %v115 = vpack.c.b16 %v114, %v113
    %v122 = vunpack.c.l.b16 %v50
    %v123 = vunpack.c.l.b16 %v51
    %v124 = vunpack.c.l.b16 %v52
    %v125 = vunpack.c.l.b16 %v53
    %v126 = vunpack.c.l.b16 %v54
    %v127 = vunpack.c.l.b16 %v55
    %v128 = vpack.c.b16 %v123, %v122
    %v129 = vpack.c.b16 %v125, %v124
    %v130 = vpack.c.b16 %v127, %v126
    %vm134 = vcmask 392192
    %v136 = vsel %vm134, %v115, 0
    %138 = vmatprep.subr.bf16.mxu0 0
    %139 = vmatpush1.bf16.msra.mxu0 %v128
    %140 = vmatprep.subr.bf16.mxu0 0
    %141 = vmatpush1.bf16.msra.mxu0 %v129
    %142 = vmatprep.subr.bf16.mxu0 0
    %143 = vmatpush1.bf16.msra.mxu0 %v130
    %144 = vmatprep.subr.bf16.mxu0 0
    %145 = vmatpush1.bf16.msra.mxu0 0
    %146 = vmatprep.subr.bf16.mxu0 0
    %147 = vmatpush1.bf16.msra.mxu0 0
    %148 = vmatprep.subr.bf16.mxu0 0
    %149 = vmatpush1.bf16.msra.mxu0 0
    %150 = vmatprep.subr.bf16.mxu0 0
    %151 = vmatpush1.bf16.msra.mxu0 0
    %152 = vmatprep.subr.bf16.mxu0 0
    %153 = vmatpush1.bf16.msra.mxu0 0
    %154 = vmatprep.subr.bf16.mxu0 0
    %155 = vmatpush1.bf16.msra.mxu0 0
    %156 = vmatprep.subr.bf16.mxu0 0
    %157 = vmatpush1.bf16.msra.mxu0 0
    %158 = vmatprep.subr.bf16.mxu0 0
    %159 = vmatpush1.bf16.msra.mxu0 0
    %160 = vmatprep.subr.bf16.mxu0 0
    %161 = vmatpush1.bf16.msra.mxu0 0
    %162 = vmatprep.subr.bf16.mxu0 0
    %163 = vmatpush1.bf16.msra.mxu0 0
    %164 = vmatprep.subr.bf16.mxu0 0
    %165 = vmatpush1.bf16.msra.mxu0 0
    %166 = vmatprep.subr.bf16.mxu0 0
    %167 = vmatpush1.bf16.msra.mxu0 0
    %168 = vmatprep.subr.bf16.mxu0 0
    %169 = vmatpush1.bf16.msra.mxu0 0
    %170 = vmatprep.mubr.bf16.mxu0 0
    %171 = vmatmul.mubr.bf16.gmra.mrb[0].mxu0 %v136
    %v172 = vpop.f32.mrb[0].mxu0
    %v173 = vadd.f32 %v105, %v172
    %v174 = vpop.f32.mrb[0].mxu0
    %v175 = vpop.f32.mrb[0].mxu0
    %v176 = vadd.f32 %v108, %v175
    %v177 = vpop.f32.mrb[0].mxu0
    %178 = vdwg.mxu0
    %v179 = vld [vmem:[#allocation4] sm:$0x1]
    %v180 = vlaneseq
    %v181 = vshrl.u32 %v180, 7
    %v182 = vsub.s32 0, %v181
    %v183 = vrot.slane %v179, %v182
    %v184 = vadd.f32 %v173, %v183
    %v185 = vadd.f32 %v176, %v183
    %v186 = vld [vmem:[#allocation4 + $0x8] sm:$0x1]
    %v187 = vld [vmem:[#allocation4 + $0x10] sm:$0x1]
    %vm188 = vcmask 523264
    %v189 = vsel %vm188, %v184, 0.0
    %190 = vadd.xlane.f32.xlu0 %v189
    %v191 = vpop.xlane.xlu0 %190
    %v192 = vsel %vm188, %v185, 0.0
    %193 = vadd.xlane.f32.xlu0 %v192
    %v194 = vpop.xlane.xlu0 %193
    %v195 = vrcp.pop 64.0
    %v196 = vmul.f32 %v191, %v195
    %v197 = vmul.f32 %v194, %v195
    %v198 = vsub.f32 %v184, %v196
    %v199 = vsub.f32 %v185, %v197
    %v200 = vmul.f32 %v198, %v198
    %v201 = vmul.f32 %v199, %v199
    %v202 = vsel %vm188, %v200, 0.0
    %203 = vadd.xlane.f32.xlu0 %v202
    %v204 = vpop.xlane.xlu0 %203
    %v205 = vsel %vm188, %v201, 0.0
    %206 = vadd.xlane.f32.xlu0 %v205
    %v207 = vpop.xlane.xlu0 %206
    %v208 = vmul.f32 %v204, %v195
    %v209 = vmul.f32 %v207, %v195
    %v210 = vadd.f32 %v208, 1e-05
    %v211 = vadd.f32 %v209, 1e-05
    %v212 = vrsqrt.pop %v210
    %v213 = vrsqrt.pop %v211
    %v214 = vmul.f32 %v198, %v212
    %v215 = vmul.f32 %v199, %v213
    %v216 = vlaneseq
    %v217 = vshrl.u32 %v216, 7
    %v218 = vsub.s32 0, %v217
    %v219 = vrot.slane %v186, %v218
    %v220 = vmul.f32 %v214, %v219
    %v221 = vmul.f32 %v215, %v219
    %v222 = vlaneseq
    %v223 = vshrl.u32 %v222, 7
    %v224 = vsub.s32 0, %v223
    %v225 = vrot.slane %v187, %v224
    %v226 = vadd.f32 %v220, %v225
    %v227 = vadd.f32 %v221, %v225
    %v228 = vmul.f32 %v226, 0.5
    %v229 = vmul.f32 %v227, 0.5
    %v230 = vmul.f32 %v226, 0.044715
    %v231 = vmul.f32 %v227, 0.044715
    %v232 = vmul.f32 %v230, %v226
    %v233 = vmul.f32 %v231, %v227
    %v234 = vmul.f32 %v232, %v226
    %v235 = vmul.f32 %v233, %v227
    %v236 = vadd.f32 %v226, %v234
    %v237 = vadd.f32 %v227, %v235
    %v238 = vmul.f32 %v236, 0.7978846
    %v239 = vmul.f32 %v237, 0.7978846
    %v240 = vtanh.pop %v238
    %v241 = vtanh.pop %v239
    %v242 = vadd.f32 %v240, 1.0
    %v243 = vadd.f32 %v241, 1.0
    %v244 = vmul.f32 %v228, %v242
    %v245 = vmul.f32 %v229, %v243
    %v246 = vpack.c.bf16 %v245, %v244
    %v247 = vld [vmem:[#allocation2 + $0x20] sm:$0xf]
    %v248 = vld [vmem:[#allocation2 + $0x24] sm:$0xf]
    %v249 = vld [vmem:[#allocation2 + $0x28] sm:$0xf]
    %v250 = vld [vmem:[#allocation2 + $0x2c] sm:$0xf]
    %v251 = vld [vmem:[#allocation2 + $0x30] sm:$0xf]
    %v252 = vld [vmem:[#allocation2 + $0x34] sm:$0xf]
    %v253 = vld [vmem:[#allocation2 + $0x38] sm:$0xf]
    %v254 = vld [vmem:[#allocation2 + $0x3c] sm:$0xf]
    %v255 = vld [vmem:[#allocation4 + $0x18] sm:$0x1]
    %v256 = vlaneseq
    %v257 = vshrl.u32 %v256, 7
    %v258 = vsub.s32 0, %v257
    %v259 = vrot.slane %v255, %v258
    %v268 = vunpack.c.l.b16 %v247
    %v269 = vunpack.c.l.b16 %v248
    %v270 = vunpack.c.l.b16 %v249
    %v271 = vunpack.c.l.b16 %v250
    %v272 = vunpack.c.l.b16 %v251
    %v273 = vunpack.c.l.b16 %v252
    %v274 = vunpack.c.l.b16 %v253
    %v275 = vunpack.c.l.b16 %v254
    %v276 = vpack.c.b16 %v269, %v268
    %v277 = vpack.c.b16 %v271, %v270
    %v278 = vpack.c.b16 %v273, %v272
    %v279 = vpack.c.b16 %v275, %v274
    %v285 = vsel %vm188, %v246, 0
    %287 = vmatprep.subr.bf16.mxu0 0
    %288 = vmatpush1.bf16.msra.mxu0 %v276
    %289 = vmatprep.subr.bf16.mxu0 0
    %290 = vmatpush1.bf16.msra.mxu0 %v277
    %291 = vmatprep.subr.bf16.mxu0 0
    %292 = vmatpush1.bf16.msra.mxu0 %v278
    %293 = vmatprep.subr.bf16.mxu0 0
    %294 = vmatpush1.bf16.msra.mxu0 %v279
    %295 = vmatprep.subr.bf16.mxu0 0
    %296 = vmatpush1.bf16.msra.mxu0 0
    %297 = vmatprep.subr.bf16.mxu0 0
    %298 = vmatpush1.bf16.msra.mxu0 0
    %299 = vmatprep.subr.bf16.mxu0 0
    %300 = vmatpush1.bf16.msra.mxu0 0
    %301 = vmatprep.subr.bf16.mxu0 0
    %302 = vmatpush1.bf16.msra.mxu0 0
    %303 = vmatprep.subr.bf16.mxu0 0
    %304 = vmatpush1.bf16.msra.mxu0 0
    %305 = vmatprep.subr.bf16.mxu0 0
    %306 = vmatpush1.bf16.msra.mxu0 0
    %307 = vmatprep.subr.bf16.mxu0 0
    %308 = vmatpush1.bf16.msra.mxu0 0
    %309 = vmatprep.subr.bf16.mxu0 0
    %310 = vmatpush1.bf16.msra.mxu0 0
    %311 = vmatprep.subr.bf16.mxu0 0
    %312 = vmatpush1.bf16.msra.mxu0 0
    %313 = vmatprep.subr.bf16.mxu0 0
    %314 = vmatpush1.bf16.msra.mxu0 0
    %315 = vmatprep.subr.bf16.mxu0 0
    %316 = vmatpush1.bf16.msra.mxu0 0
    %317 = vmatprep.subr.bf16.mxu0 0
    %318 = vmatpush1.bf16.msra.mxu0 0
    %319 = vmatprep.mubr.bf16.mxu0 0
    %320 = vmatmul.mubr.bf16.gmra.mrb[0].mxu0 %v285
    %v321 = vpop.f32.mrb[0].mxu0
    %v322 = vadd.f32 %v259, %v321
    %v323 = vpop.f32.mrb[0].mxu0
    %v324 = vpop.f32.mrb[0].mxu0
    %v325 = vadd.f32 %v259, %v324
    %v326 = vpop.f32.mrb[0].mxu0
    %327 = vdwg.mxu0
    %v328 = vld [vmem:[#allocation4 + $0x20] sm:$0x1]
    %v329 = vld [vmem:[#allocation4 + $0x28] sm:$0x1]
    %v330 = vsel %vm188, %v322, 0.0
    %331 = vadd.xlane.f32.xlu0 %v330
    %v332 = vpop.xlane.xlu0 %331
    %v333 = vsel %vm188, %v325, 0.0
    %334 = vadd.xlane.f32.xlu0 %v333
    %v335 = vpop.xlane.xlu0 %334
    %v336 = vmul.f32 %v332, %v195
    %v337 = vmul.f32 %v335, %v195
    %v338 = vsub.f32 %v322, %v336
    %v339 = vsub.f32 %v325, %v337
    %v340 = vmul.f32 %v338, %v338
    %v341 = vmul.f32 %v339, %v339
    %v342 = vsel %vm188, %v340, 0.0
    %343 = vadd.xlane.f32.xlu0 %v342
    %v344 = vpop.xlane.xlu0 %343
    %v345 = vsel %vm188, %v341, 0.0
    %346 = vadd.xlane.f32.xlu0 %v345
    %v347 = vpop.xlane.xlu0 %346
    %v348 = vmul.f32 %v344, %v195
    %v349 = vmul.f32 %v347, %v195
    %v350 = vadd.f32 %v348, 1e-05
    %v351 = vadd.f32 %v349, 1e-05
    %v352 = vrsqrt.pop %v350
    %v353 = vrsqrt.pop %v351
    %v354 = vmul.f32 %v338, %v352
    %v355 = vmul.f32 %v339, %v353
    %v356 = vlaneseq
    %v357 = vshrl.u32 %v356, 7
    %v358 = vsub.s32 0, %v357
    %v359 = vrot.slane %v328, %v358
    %v360 = vmul.f32 %v354, %v359
    %v361 = vmul.f32 %v355, %v359
    %v362 = vlaneseq
    %v363 = vshrl.u32 %v362, 7
    %v364 = vsub.s32 0, %v363
    %v365 = vrot.slane %v329, %v364
    %v366 = vadd.f32 %v360, %v365
    %v367 = vadd.f32 %v361, %v365
    %370 = vrot.lane.b32.xlu0 %v184, 64
    %v371 = vpop.permute.xlu0 %370
    %372 = vrot.lane.b32.xlu0 %v185, 64
    %v373 = vpop.permute.xlu0 %372
    %v376 = vadd.f32 %v366, %v371
    %v377 = vadd.f32 %v367, %v373
    %v378 = vmul.f32 %v376, 0.5
    %v379 = vmul.f32 %v377, 0.5
    %v380 = vmul.f32 %v376, 0.044715
    %v381 = vmul.f32 %v377, 0.044715
    %v382 = vmul.f32 %v380, %v376
    %v383 = vmul.f32 %v381, %v377
    %v384 = vmul.f32 %v382, %v376
    %v385 = vmul.f32 %v383, %v377
    %v386 = vadd.f32 %v376, %v384
    %v387 = vadd.f32 %v377, %v385
    %v388 = vmul.f32 %v386, 0.7978846
    %v389 = vmul.f32 %v387, 0.7978846
    %v390 = vtanh.pop %v388
    %v391 = vtanh.pop %v389
    %v392 = vadd.f32 %v390, 1.0
    %v393 = vadd.f32 %v391, 1.0
    %v394 = vmul.f32 %v378, %v392
    %v395 = vmul.f32 %v379, %v393
    %v396 = vpack.c.bf16 %v395, %v394
    %v397 = vld [vmem:[#allocation2 + $0x40] sm:$0xf]
    %v398 = vld [vmem:[#allocation2 + $0x44] sm:$0xf]
    %v399 = vld [vmem:[#allocation2 + $0x48] sm:$0xf]
    %v400 = vld [vmem:[#allocation2 + $0x4c] sm:$0xf]
    %v401 = vld [vmem:[#allocation2 + $0x50] sm:$0xf]
    %v402 = vld [vmem:[#allocation2 + $0x54] sm:$0xf]
    %v403 = vld [vmem:[#allocation2 + $0x58] sm:$0xf]
    %v404 = vld [vmem:[#allocation2 + $0x5c] sm:$0xf]
    %v405 = vld [vmem:[#allocation4 + $0x30] sm:$0x1]
    %v406 = vlaneseq
    %v407 = vshrl.u32 %v406, 7
    %v408 = vsub.s32 0, %v407
    %v409 = vrot.slane %v405, %v408
    %v418 = vunpack.c.l.b16 %v397
    %v419 = vunpack.c.l.b16 %v398
    %v420 = vunpack.c.l.b16 %v399
    %v421 = vunpack.c.l.b16 %v400
    %v422 = vunpack.c.l.b16 %v401
    %v423 = vunpack.c.l.b16 %v402
    %v424 = vunpack.c.l.b16 %v403
    %v425 = vunpack.c.l.b16 %v404
    %v426 = vpack.c.b16 %v419, %v418
    %v427 = vpack.c.b16 %v421, %v420
    %v428 = vpack.c.b16 %v423, %v422
    %v429 = vpack.c.b16 %v425, %v424
    %v435 = vsel %vm188, %v396, 0
    %437 = vmatprep.subr.bf16.mxu0 0
    %438 = vmatpush1.bf16.msra.mxu0 %v426
    %439 = vmatprep.subr.bf16.mxu0 0
    %440 = vmatpush1.bf16.msra.mxu0 %v427
    %441 = vmatprep.subr.bf16.mxu0 0
    %442 = vmatpush1.bf16.msra.mxu0 %v428
    %443 = vmatprep.subr.bf16.mxu0 0
    %444 = vmatpush1.bf16.msra.mxu0 %v429
    %445 = vmatprep.subr.bf16.mxu0 0
    %446 = vmatpush1.bf16.msra.mxu0 0
    %447 = vmatprep.subr.bf16.mxu0 0
    %448 = vmatpush1.bf16.msra.mxu0 0
    %449 = vmatprep.subr.bf16.mxu0 0
    %450 = vmatpush1.bf16.msra.mxu0 0
    %451 = vmatprep.subr.bf16.mxu0 0
    %452 = vmatpush1.bf16.msra.mxu0 0
    %453 = vmatprep.subr.bf16.mxu0 0
    %454 = vmatpush1.bf16.msra.mxu0 0
    %455 = vmatprep.subr.bf16.mxu0 0
    %456 = vmatpush1.bf16.msra.mxu0 0
    %457 = vmatprep.subr.bf16.mxu0 0
    %458 = vmatpush1.bf16.msra.mxu0 0
    %459 = vmatprep.subr.bf16.mxu0 0
    %460 = vmatpush1.bf16.msra.mxu0 0
    %461 = vmatprep.subr.bf16.mxu0 0
    %462 = vmatpush1.bf16.msra.mxu0 0
    %463 = vmatprep.subr.bf16.mxu0 0
    %464 = vmatpush1.bf16.msra.mxu0 0
    %465 = vmatprep.subr.bf16.mxu0 0
    %466 = vmatpush1.bf16.msra.mxu0 0
    %467 = vmatprep.subr.bf16.mxu0 0
    %468 = vmatpush1.bf16.msra.mxu0 0
    %469 = vmatprep.mubr.bf16.mxu0 0
    %470 = vmatmul.mubr.bf16.gmra.mrb[0].mxu0 %v435
    %v471 = vpop.f32.mrb[0].mxu0
    %v472 = vadd.f32 %v409, %v471
    %v473 = vpop.f32.mrb[0].mxu0
    %v474 = vpop.f32.mrb[0].mxu0
    %v475 = vadd.f32 %v409, %v474
    %v476 = vpop.f32.mrb[0].mxu0
    %477 = vdwg.mxu0
    %v478 = vld [vmem:[#allocation4 + $0x38] sm:$0x1]
    %v479 = vld [vmem:[#allocation4 + $0x40] sm:$0x1]
    %vm480 = vcmask 261120
    %v481 = vsel %vm480, %v472, 0.0
    %482 = vadd.xlane.f32.xlu0 %v481
    %v483 = vpop.xlane.xlu0 %482
    %v484 = vsel %vm480, %v475, 0.0
    %485 = vadd.xlane.f32.xlu0 %v484
    %v486 = vpop.xlane.xlu0 %485
    %v487 = vrcp.pop 32.0
    %v488 = vmul.f32 %v483, %v487
    %v489 = vmul.f32 %v486, %v487
    %v490 = vsub.f32 %v472, %v488
    %v491 = vsub.f32 %v475, %v489
    %v492 = vmul.f32 %v490, %v490
    %v493 = vmul.f32 %v491, %v491
    %v494 = vsel %vm480, %v492, 0.0
    %495 = vadd.xlane.f32.xlu0 %v494
    %v496 = vpop.xlane.xlu0 %495
    %v497 = vsel %vm480, %v493, 0.0
    %498 = vadd.xlane.f32.xlu0 %v497
    %v499 = vpop.xlane.xlu0 %498
    %v500 = vmul.f32 %v496, %v487
    %v501 = vmul.f32 %v499, %v487
    %v502 = vadd.f32 %v500, 1e-05
    %v503 = vadd.f32 %v501, 1e-05
    %v504 = vrsqrt.pop %v502
    %v505 = vrsqrt.pop %v503
    %v506 = vmul.f32 %v490, %v504
    %v507 = vmul.f32 %v491, %v505
    %v508 = vlaneseq
    %v509 = vshrl.u32 %v508, 7
    %v510 = vsub.s32 0, %v509
    %v511 = vrot.slane %v478, %v510
    %v512 = vmul.f32 %v506, %v511
    %v513 = vmul.f32 %v507, %v511
    %v514 = vlaneseq
    %v515 = vshrl.u32 %v514, 7
    %v516 = vsub.s32 0, %v515
    %v517 = vrot.slane %v479, %v516
    %v518 = vadd.f32 %v512, %v517
    %v519 = vadd.f32 %v513, %v517
    %v520 = vmul.f32 %v518, 0.5
    %v521 = vmul.f32 %v519, 0.5
    %v522 = vmul.f32 %v518, 0.044715
    %v523 = vmul.f32 %v519, 0.044715
    %v524 = vmul.f32 %v522, %v518
    %v525 = vmul.f32 %v523, %v519
    %v526 = vmul.f32 %v524, %v518
    %v527 = vmul.f32 %v525, %v519
    %v528 = vadd.f32 %v518, %v526
    %v529 = vadd.f32 %v519, %v527
    %v530 = vmul.f32 %v528, 0.7978846
    %v531 = vmul.f32 %v529, 0.7978846
    %v532 = vtanh.pop %v530
    %v533 = vtanh.pop %v531
    %v534 = vadd.f32 %v532, 1.0
    %v535 = vadd.f32 %v533, 1.0
    %v536 = vmul.f32 %v520, %v534
    %v537 = vmul.f32 %v521, %v535
    %v538 = vpack.c.bf16 %v537, %v536
    %v539 = vld [vmem:[#allocation2 + $0x60] sm:$0xf]
    %v540 = vld [vmem:[#allocation2 + $0x64] sm:$0xf]
    %v541 = vld [vmem:[#allocation2 + $0x68] sm:$0xf]
    %v542 = vld [vmem:[#allocation2 + $0x6c] sm:$0xf]
    %v543 = vld [vmem:[#allocation4 + $0x48] sm:$0x1]
    %v544 = vlaneseq
    %v545 = vshrl.u32 %v544, 7
    %v546 = vsub.s32 0, %v545
    %v547 = vrot.slane %v543, %v546
    %v552 = vunpack.c.l.b16 %v539
    %v553 = vunpack.c.l.b16 %v540
    %v554 = vunpack.c.l.b16 %v541
    %v555 = vunpack.c.l.b16 %v542
    %v556 = vpack.c.b16 %v553, %v552
    %v557 = vpack.c.b16 %v555, %v554
    %v561 = vsel %vm480, %v538, 0
    %563 = vmatprep.subr.bf16.mxu0 0
    %564 = vmatpush1.bf16.msra.mxu0 %v556
    %565 = vmatprep.subr.bf16.mxu0 0
    %566 = vmatpush1.bf16.msra.mxu0 %v557
    %567 = vmatprep.subr.bf16.mxu0 0
    %568 = vmatpush1.bf16.msra.mxu0 0
    %569 = vmatprep.subr.bf16.mxu0 0
    %570 = vmatpush1.bf16.msra.mxu0 0
    %571 = vmatprep.subr.bf16.mxu0 0
    %572 = vmatpush1.bf16.msra.mxu0 0
    %573 = vmatprep.subr.bf16.mxu0 0
    %574 = vmatpush1.bf16.msra.mxu0 0
    %575 = vmatprep.subr.bf16.mxu0 0
    %576 = vmatpush1.bf16.msra.mxu0 0
    %577 = vmatprep.subr.bf16.mxu0 0
    %578 = vmatpush1.bf16.msra.mxu0 0
    %579 = vmatprep.subr.bf16.mxu0 0
    %580 = vmatpush1.bf16.msra.mxu0 0
    %581 = vmatprep.subr.bf16.mxu0 0
    %582 = vmatpush1.bf16.msra.mxu0 0
    %583 = vmatprep.subr.bf16.mxu0 0
    %584 = vmatpush1.bf16.msra.mxu0 0
    %585 = vmatprep.subr.bf16.mxu0 0
    %586 = vmatpush1.bf16.msra.mxu0 0
    %587 = vmatprep.subr.bf16.mxu0 0
    %588 = vmatpush1.bf16.msra.mxu0 0
    %589 = vmatprep.subr.bf16.mxu0 0
    %590 = vmatpush1.bf16.msra.mxu0 0
    %591 = vmatprep.subr.bf16.mxu0 0
    %592 = vmatpush1.bf16.msra.mxu0 0
    %593 = vmatprep.subr.bf16.mxu0 0
    %594 = vmatpush1.bf16.msra.mxu0 0
    %595 = vmatprep.mubr.bf16.mxu0 0
    %596 = vmatmul.mubr.bf16.gmra.mrb[0].mxu0 %v561
    %v597 = vpop.f32.mrb[0].mxu0
    %v598 = vadd.f32 %v547, %v597
    %v599 = vpop.f32.mrb[0].mxu0
    %v600 = vpop.f32.mrb[0].mxu0
    %v601 = vadd.f32 %v547, %v600
    %v602 = vpop.f32.mrb[0].mxu0
    %603 = vdwg.mxu0
    %v604 = vld [vmem:[#allocation4 + $0x50] sm:$0x1]
    %v605 = vld [vmem:[#allocation4 + $0x58] sm:$0x1]
    %v606 = vsel %vm480, %v598, 0.0
    %607 = vadd.xlane.f32.xlu0 %v606
    %v608 = vpop.xlane.xlu0 %607
    %v609 = vsel %vm480, %v601, 0.0
    %610 = vadd.xlane.f32.xlu0 %v609
    %v611 = vpop.xlane.xlu0 %610
    %v612 = vmul.f32 %v608, %v487
    %v613 = vmul.f32 %v611, %v487
    %v614 = vsub.f32 %v598, %v612
    %v615 = vsub.f32 %v601, %v613
    %v616 = vmul.f32 %v614, %v614
    %v617 = vmul.f32 %v615, %v615
    %v618 = vsel %vm480, %v616, 0.0
    %619 = vadd.xlane.f32.xlu0 %v618
    %v620 = vpop.xlane.xlu0 %619
    %v621 = vsel %vm480, %v617, 0.0
    %622 = vadd.xlane.f32.xlu0 %v621
    %v623 = vpop.xlane.xlu0 %622
    %v624 = vmul.f32 %v620, %v487
    %v625 = vmul.f32 %v623, %v487
    %v626 = vadd.f32 %v624, 1e-05
    %v627 = vadd.f32 %v625, 1e-05
    %v628 = vrsqrt.pop %v626
    %v629 = vrsqrt.pop %v627
    %v630 = vmul.f32 %v614, %v628
    %v631 = vmul.f32 %v615, %v629
    %v632 = vlaneseq
    %v633 = vshrl.u32 %v632, 7
    %v634 = vsub.s32 0, %v633
    %v635 = vrot.slane %v604, %v634
    %v636 = vmul.f32 %v630, %v635
    %v637 = vmul.f32 %v631, %v635
    %v638 = vlaneseq
    %v639 = vshrl.u32 %v638, 7
    %v640 = vsub.s32 0, %v639
    %v641 = vrot.slane %v605, %v640
    %v642 = vadd.f32 %v636, %v641
    %v643 = vadd.f32 %v637, %v641
    %646 = vrot.lane.b32.xlu0 %v472, 96
    %v647 = vpop.permute.xlu0 %646
    %648 = vrot.lane.b32.xlu0 %v475, 96
    %v649 = vpop.permute.xlu0 %648
    %v652 = vadd.f32 %v642, %v647
    %v653 = vadd.f32 %v643, %v649
    %v654 = vmul.f32 %v652, 0.5
    %v655 = vmul.f32 %v653, 0.5
    %v656 = vmul.f32 %v652, 0.044715
    %v657 = vmul.f32 %v653, 0.044715
    %v658 = vmul.f32 %v656, %v652
    %v659 = vmul.f32 %v657, %v653
    %v660 = vmul.f32 %v658, %v652
    %v661 = vmul.f32 %v659, %v653
    %v662 = vadd.f32 %v652, %v660
    %v663 = vadd.f32 %v653, %v661
    %v664 = vmul.f32 %v662, 0.7978846
    %v665 = vmul.f32 %v663, 0.7978846
    %v666 = vtanh.pop %v664
    %v667 = vtanh.pop %v665
    %v668 = vadd.f32 %v666, 1.0
    %v669 = vadd.f32 %v667, 1.0
    %v670 = vmul.f32 %v654, %v668
    %v671 = vmul.f32 %v655, %v669
    %v672 = vpack.c.bf16 %v671, %v670
    %v673 = vld [vmem:[#allocation2 + $0x70] sm:$0xf]
    %v674 = vld [vmem:[#allocation2 + $0x74] sm:$0xf]
    %v675 = vld [vmem:[#allocation2 + $0x78] sm:$0xf]
    %v676 = vld [vmem:[#allocation2 + $0x7c] sm:$0xf]
    %v677 = vld [vmem:[#allocation4 + $0x60] sm:$0x1]
    %v678 = vlaneseq
    %v679 = vshrl.u32 %v678, 7
    %v680 = vsub.s32 0, %v679
    %v681 = vrot.slane %v677, %v680
    %v686 = vunpack.c.l.b16 %v673
    %v687 = vunpack.c.l.b16 %v674
    %v688 = vunpack.c.l.b16 %v675
    %v689 = vunpack.c.l.b16 %v676
    %v690 = vpack.c.b16 %v687, %v686
    %v691 = vpack.c.b16 %v689, %v688
    %v695 = vsel %vm480, %v672, 0
    %697 = vmatprep.subr.bf16.mxu0 0
    %698 = vmatpush1.bf16.msra.mxu0 %v690
    %699 = vmatprep.subr.bf16.mxu0 0
    %700 = vmatpush1.bf16.msra.mxu0 %v691
    %701 = vmatprep.subr.bf16.mxu0 0
    %702 = vmatpush1.bf16.msra.mxu0 0
    %703 = vmatprep.subr.bf16.mxu0 0
    %704 = vmatpush1.bf16.msra.mxu0 0
    %705 = vmatprep.subr.bf16.mxu0 0
    %706 = vmatpush1.bf16.msra.mxu0 0
    %707 = vmatprep.subr.bf16.mxu0 0
    %708 = vmatpush1.bf16.msra.mxu0 0
    %709 = vmatprep.subr.bf16.mxu0 0
    %710 = vmatpush1.bf16.msra.mxu0 0
    %711 = vmatprep.subr.bf16.mxu0 0
    %712 = vmatpush1.bf16.msra.mxu0 0
    %713 = vmatprep.subr.bf16.mxu0 0
    %714 = vmatpush1.bf16.msra.mxu0 0
    %715 = vmatprep.subr.bf16.mxu0 0
    %716 = vmatpush1.bf16.msra.mxu0 0
    %717 = vmatprep.subr.bf16.mxu0 0
    %718 = vmatpush1.bf16.msra.mxu0 0
    %719 = vmatprep.subr.bf16.mxu0 0
    %720 = vmatpush1.bf16.msra.mxu0 0
    %721 = vmatprep.subr.bf16.mxu0 0
    %722 = vmatpush1.bf16.msra.mxu0 0
    %723 = vmatprep.subr.bf16.mxu0 0
    %724 = vmatpush1.bf16.msra.mxu0 0
    %725 = vmatprep.subr.bf16.mxu0 0
    %726 = vmatpush1.bf16.msra.mxu0 0
    %727 = vmatprep.subr.bf16.mxu0 0
    %728 = vmatpush1.bf16.msra.mxu0 0
    %729 = vmatprep.mubr.bf16.mxu0 0
    %730 = vmatmul.mubr.bf16.gmra.mrb[0].mxu0 %v695
    %v731 = vpop.f32.mrb[0].mxu0
    %v732 = vadd.f32 %v681, %v731
    %v733 = vpop.f32.mrb[0].mxu0
    %v734 = vpop.f32.mrb[0].mxu0
    %v735 = vadd.f32 %v681, %v734
    %v736 = vpop.f32.mrb[0].mxu0
    %737 = vdwg.mxu0
    %v738 = vmul.f32 %v732, 0.5
    %v739 = vmul.f32 %v735, 0.5
    %v740 = vmul.f32 %v732, 0.044715
    %v741 = vmul.f32 %v735, 0.044715
    %v742 = vmul.f32 %v740, %v732
    %v743 = vmul.f32 %v741, %v735
    %v744 = vmul.f32 %v742, %v732
    %v745 = vmul.f32 %v743, %v735
    %v746 = vadd.f32 %v732, %v744
    %v747 = vadd.f32 %v735, %v745
    %v748 = vmul.f32 %v746, 0.7978846
    %v749 = vmul.f32 %v747, 0.7978846
    %v750 = vtanh.pop %v748
    %v751 = vtanh.pop %v749
    %v752 = vadd.f32 %v750, 1.0
    %v753 = vadd.f32 %v751, 1.0
    %v754 = vmul.f32 %v738, %v752
    %v755 = vmul.f32 %v739, %v753
    %v756 = vld [vmem:[#allocation4 + $0x68] sm:$0x1]
    %v757 = vld [vmem:[#allocation4 + $0x70] sm:$0x1]
    %vm758 = vcmask 130048
    %v759 = vsel %vm758, %v754, 0.0
    %760 = vadd.xlane.f32.xlu0 %v759
    %v761 = vpop.xlane.xlu0 %760
    %v762 = vsel %vm758, %v755, 0.0
    %763 = vadd.xlane.f32.xlu0 %v762
    %v764 = vpop.xlane.xlu0 %763
    %v765 = vrcp.pop 16.0
    %v766 = vmul.f32 %v761, %v765
    %v767 = vmul.f32 %v764, %v765
    %v768 = vsub.f32 %v754, %v766
    %v769 = vsub.f32 %v755, %v767
    %v770 = vmul.f32 %v768, %v768
    %v771 = vmul.f32 %v769, %v769
    %v772 = vsel %vm758, %v770, 0.0
    %773 = vadd.xlane.f32.xlu0 %v772
    %v774 = vpop.xlane.xlu0 %773
    %v775 = vsel %vm758, %v771, 0.0
    %776 = vadd.xlane.f32.xlu0 %v775
    %v777 = vpop.xlane.xlu0 %776
    %v778 = vmul.f32 %v774, %v765
    %v779 = vmul.f32 %v777, %v765
    %v780 = vadd.f32 %v778, 1e-05
    %v781 = vadd.f32 %v779, 1e-05
    %v782 = vrsqrt.pop %v780
    %v783 = vrsqrt.pop %v781
    %v784 = vmul.f32 %v768, %v782
    %v785 = vmul.f32 %v769, %v783
    %v786 = vlaneseq
    %v787 = vshrl.u32 %v786, 7
    %v788 = vsub.s32 0, %v787
    %v789 = vrot.slane %v756, %v788
    %v790 = vmul.f32 %v784, %v789
    %v791 = vmul.f32 %v785, %v789
    %v792 = vlaneseq
    %v793 = vshrl.u32 %v792, 7
    %v794 = vsub.s32 0, %v793
    %v795 = vrot.slane %v757, %v794
    %v796 = vadd.f32 %v790, %v795
    %v797 = vadd.f32 %v791, %v795
    %v798 = vld [vmem:[#allocation4 + $0x78] sm:$0x1]
    %v799 = vld [vmem:[#allocation4 + $0x80] sm:$0x1]
    %v800 = vlaneseq
    %v801 = vshrl.u32 %v800, 7
    %v802 = vsub.s32 0, %v801
    %v803 = vrot.slane %v798, %v802
    %v804 = vmul.f32 %v796, %v803
    %v805 = vmul.f32 %v797, %v803
    %v806 = vsel %vm758, %v804, 0.0
    %807 = vadd.xlane.f32.xlu0 %v806
    %v808 = vpop.xlane.xlu0 %807
    %v809 = vsel %vm758, %v805, 0.0
    %810 = vadd.xlane.f32.xlu0 %v809
    %v811 = vpop.xlane.xlu0 %810
    %v812 = vlaneseq
    %v813 = vshrl.u32 %v812, 7
    %v814 = vsub.s32 0, %v813
    %v815 = vrot.slane %v799, %v814
    %v816 = vadd.f32 %v808, %v815
    %v817 = vadd.f32 %v811, %v815
    %vm818 = vcmask 7168
    %819 = vst.msk [vmem:[%s4] sm:$0xff] %vm818, %v816
    %820 = vst.msk [vmem:[%s4 + $0x8] sm:$0xff] %vm818, %v817
    // Predicated region
    $region26: #{forward.1} parent=1 // pred_check
      _
    $region27: #{forward.1} parent=1 // pred_check_branch
      %822 = sbr.rel (0) target = $region29
    $region28: #{forward.1} parent=1 // pred_region
      _
    $region29: #{forward.1} parent=1 // pred_fallthru
      _
    // Predicated region
    $region30: #{forward.1} parent=1 // pred_check
      _
    $region31: #{forward.1} parent=1 // pred_check_branch
      %824 = sbr.rel (0) target = $region33
    $region32: #{forward.1} parent=1 // pred_region
      _
    $region33: #{forward.1} parent=1 // pred_fallthru
      _
    %825 = vsyncpa [#allocation3], 1
    %826 = vsyncpa [#allocation5], 1

</llo_original>
